<compile_context>
chip_gen: v5e
topology: v5e:2x2
jax: 0.10.0
libtpu: 0.0.40
codegen_flags: <defaults>
</compile_context>

<pallas_src>
import jax
import jax.numpy as jnp
from jax.experimental import pallas as pl
from jax.experimental.pallas import tpu as pltpu

LANES = 128
ROW_BLOCK_MAX = 2048  # 2048 x 128 f32 = 1 MiB per input block


def _make_masked_l1_sum_kernel(rows_valid, row_block, steps, needs_mask):
    """Kernel closure; all arguments are static Python ints / bools."""

    def kernel(x_ref, y_ref, m_ref, out_ref):
        i = pl.program_id(1)  # reduction ("arbitrary") axis

        @pl.when(i == 0)
        def _init():
            out_ref[...] = jnp.zeros_like(out_ref)

        # Cast after load: inputs stream at native dtype, math in f32.
        x = x_ref[...].astype(jnp.float32)
        y = y_ref[...].astype(jnp.float32)
        m = m_ref[...].astype(jnp.float32)

        # NOTE: identical to |x*m - y*m| for 0/1 masks (the intended use);
        # may differ in the last ulp for arbitrary-valued masks.
        vals = jnp.abs((x - y) * m)

        if needs_mask:
            # Global (unclamped) row index of this block; rows past the real
            # array extent (partial last block / clamped out-of-range blocks)
            # contribute exactly zero.
            block_idx = pl.program_id(0) * steps + i
            start_row = block_idx * row_block
            row_ids = (
                jax.lax.broadcasted_iota(jnp.int32, (row_block, LANES), 0)
                + start_row
            )
            vals = jnp.where(row_ids < rows_valid, vals, 0.0)

        # Per-lane partial: reduce over sublanes only; keep lanes resident.
        out_ref[...] += jnp.sum(vals, axis=0, keepdims=True)[None]

    return kernel


def mask_loss_forward(x, y, mask):
    """Forward of mask_loss: mean(|x*mask - y*mask|) as an f32 scalar."""
    assert x.shape == y.shape, (x.shape, y.shape)
    total = int(x.size)

    # Only materialize a broadcast mask if its shape actually differs.
    # TODO(synk): for masks like (N,1,H,W) a BlockSpec index_map that repeats
    # the mask block would avoid this HBM materialization entirely.
    if mask.shape != x.shape:
        mask = jnp.broadcast_to(mask, x.shape)
    if mask.dtype == jnp.bool_:
        mask = mask.astype(jnp.float32)

    # Flatten (free reshape) into a lane-dense (rows, 128) slab.
    xf = x.reshape(-1)
    yf = y.reshape(-1)
    mf = mask.reshape(-1)

    rows = total // LANES
    main = rows * LANES
    rem = total - main

    total_sum = jnp.float32(0.0)

    if rows > 0:
        if rem:
            xm, ym, mm = xf[:main], yf[:main], mf[:main]
        else:
            xm, ym, mm = xf, yf, mf
        x2 = xm.reshape(rows, LANES)
        y2 = ym.reshape(rows, LANES)
        m2 = mm.reshape(rows, LANES)

        # Block = full extent when small (always legal), else 2048 rows
        # (multiple of 8/16/32 so f32/bf16/int8 tiles are all fine).
        row_block = rows if rows <= ROW_BLOCK_MAX else ROW_BLOCK_MAX
        num_blocks = -(-rows // row_block)
        num_parts = 2 if num_blocks >= 2 else 1          # v7x: one per TC
        steps = -(-num_blocks // num_parts)
        needs_mask = (num_blocks * row_block != rows) or (
            num_parts * steps != num_blocks
        )

        def in_map(p, i):
            # Clamp so out-of-range partitions re-read the last valid block
            # (DMA stays in bounds); their contribution is masked to zero.
            return (jnp.minimum(p * steps + i, num_blocks - 1), 0)

        in_spec = pl.BlockSpec((row_block, LANES), in_map)
        out_spec = pl.BlockSpec((1, 1, LANES), lambda p, i: (p, 0, 0))

        bytes_in = (
            x2.size * x2.dtype.itemsize
            + y2.size * y2.dtype.itemsize
            + m2.size * m2.dtype.itemsize
        )

        partials = pl.pallas_call(
            _make_masked_l1_sum_kernel(rows, row_block, steps, needs_mask),
            out_shape=jax.ShapeDtypeStruct((num_parts, 1, LANES), jnp.float32),
            grid_spec=pltpu.PrefetchScalarGridSpec(
                num_scalar_prefetch=0,
                grid=(num_parts, steps),
                in_specs=[in_spec, in_spec, in_spec],
                out_specs=out_spec,
            ),
            compiler_params=pltpu.CompilerParams(
                dimension_semantics=("parallel", "arbitrary"),
            ),
            cost_estimate=pl.CostEstimate(
                flops=3 * main,
                transcendentals=0,
                bytes_accessed=bytes_in + num_parts * LANES * 4,
            ),
        )(x2, y2, m2)

        total_sum = total_sum + jnp.sum(partials)

    if rem:
        # < 128 leftover elements (only when numel % 128 != 0): plain JAX.
        xt = xf[main:].astype(jnp.float32)
        yt = yf[main:].astype(jnp.float32)
        mt = mf[main:].astype(jnp.float32)
        total_sum = total_sum + jnp.sum(jnp.abs((xt - yt) * mt))

    return total_sum / total


if __name__ == "__main__":

    def ref_loss(x, y, m):
        xf = x.astype(jnp.float32)
        yf = y.astype(jnp.float32)
        mf = jnp.broadcast_to(m, x.shape).astype(jnp.float32)
        return jnp.mean(jnp.abs(xf * mf - yf * mf))

    fwd = jax.jit(mask_loss_forward)

    # Case 1: small NCHW f32 (typical use of the module).
    k1, k2, k3 = jax.random.split(jax.random.PRNGKey(0), 3)
    N, C, H, W = 2, 4, 16, 16
    x = jax.random.normal(k1, (N, C, H, W), dtype=jnp.float32)
    y = jax.random.normal(k2, (N, C, H, W), dtype=jnp.float32)
    m = (jax.random.uniform(k3, (N, C, H, W)) > 0.5).astype(jnp.float32)
    loss = fwd(x, y, m)
    jax.block_until_ready(loss)
    ref = ref_loss(x, y, m)
    assert loss.shape == () and bool(jnp.isfinite(loss))
    assert jnp.allclose(loss, ref, rtol=1e-5, atol=1e-6), (loss, ref)

    # Case 2: bf16 activations, broadcastable mask, numel not divisible by 128
    # (exercises native-dtype streaming, broadcast path, and the tail path).
    k1, k2, k3 = jax.random.split(jax.random.PRNGKey(1), 3)
    x = jax.random.normal(k1, (3, 5, 17, 9), dtype=jnp.bfloat16)
    y = jax.random.normal(k2, (3, 5, 17, 9), dtype=jnp.bfloat16)
    m = (jax.random.uniform(k3, (3, 1, 17, 9)) > 0.5).astype(jnp.float32)
    loss = fwd(x, y, m)
    jax.block_until_ready(loss)
    ref = ref_loss(x, y, m)
    assert jnp.allclose(loss, ref, rtol=1e-5, atol=1e-6), (loss, ref)

    # Case 3: multi-block input (5 row blocks) exercising the 2-partition
    # "parallel" axis and the clamped/masked out-of-range block.
    k1, k2, k3 = jax.random.split(jax.random.PRNGKey(2), 3)
    x = jax.random.normal(k1, (2, 8, 320, 256), dtype=jnp.float32)
    y = jax.random.normal(k2, (2, 8, 320, 256), dtype=jnp.float32)
    m = (jax.random.uniform(k3, (2, 8, 320, 256)) > 0.5).astype(jnp.float32)
    loss = fwd(x, y, m)
    jax.block_until_ready(loss)
    ref = ref_loss(x, y, m)
    assert jnp.allclose(loss, ref, rtol=1e-4, atol=1e-6), (loss, ref)

    print("KERNEL_OK")
</pallas_src>

<mosaic_0001>
module attributes {stable_mosaic.version = 11 : i64} {
  func.func @kernel(%arg0: i32, %arg1: i32, %arg2: memref<16x128xf32, #tpu.memory_space<vmem>>, %arg3: memref<16x128xf32, #tpu.memory_space<vmem>>, %arg4: memref<16x128xf32, #tpu.memory_space<vmem>>, %arg5: memref<1x1x128xf32, #tpu.memory_space<vmem>>) attributes {dimension_semantics = [#tpu.dimension_semantics<parallel>, #tpu.dimension_semantics<arbitrary>], iteration_bounds = array<i64: 1, 1>, scalar_prefetch = 0 : i64, scratch_operands = 0 : i64, tpu.core_type = #tpu.core_type<tc>, window_params = [{transform_indices = @transform_0, window_bounds = array<i64: 16, 128>}, {transform_indices = @transform_1, window_bounds = array<i64: 16, 128>}, {transform_indices = @transform_2, window_bounds = array<i64: 16, 128>}, {transform_indices = @transform_3, window_bounds = array<i64: 1, 1, 128>}]} {
    %c0_i32 = arith.constant 0 : i32
    %0 = arith.cmpi eq, %arg1, %c0_i32 : i32
    %1 = arith.extui %0 : i1 to i32
    %c0_i32_0 = arith.constant 0 : i32
    %2 = arith.cmpi ne, %1, %c0_i32_0 : i32
    scf.if %2 {
      %cst_12 = arith.constant 0.000000e+00 : f32
      %15 = vector.broadcast %cst_12 : f32 to vector<1x1x128xf32>
      %c0_13 = arith.constant 0 : index
      %c0_14 = arith.constant 0 : index
      %c0_15 = arith.constant 0 : index
      %16 = vector.load %arg5[%c0_13, %c0_14, %c0_15] : memref<1x1x128xf32, #tpu.memory_space<vmem>>, vector<1x1x128xf32>
      tpu.vector_store %arg5[%c0_13, %c0_14, %c0_15], %15 {strides = array<i32>} : memref<1x1x128xf32, #tpu.memory_space<vmem>>, vector<1x1x128xf32>,
    } else {
    }
    %c0 = arith.constant 0 : index
    %c0_1 = arith.constant 0 : index
    %3 = vector.load %arg2[%c0, %c0_1] : memref<16x128xf32, #tpu.memory_space<vmem>>, vector<16x128xf32>
    %c0_2 = arith.constant 0 : index
    %c0_3 = arith.constant 0 : index
    %4 = vector.load %arg3[%c0_2, %c0_3] : memref<16x128xf32, #tpu.memory_space<vmem>>, vector<16x128xf32>
    %c0_4 = arith.constant 0 : index
    %c0_5 = arith.constant 0 : index
    %5 = vector.load %arg4[%c0_4, %c0_5] : memref<16x128xf32, #tpu.memory_space<vmem>>, vector<16x128xf32>
    %6 = arith.subf %3, %4 : vector<16x128xf32>
    %7 = arith.mulf %6, %5 : vector<16x128xf32>
    %8 = math.absf %7 : vector<16x128xf32>
    %c0_6 = arith.constant 0 : index
    %c0_7 = arith.constant 0 : index
    %c0_8 = arith.constant 0 : index
    %9 = vector.load %arg5[%c0_6, %c0_7, %c0_8] : memref<1x1x128xf32, #tpu.memory_space<vmem>>, vector<1x1x128xf32>
    %cst = arith.constant dense<0.000000e+00> : vector<128xf32>
    %10 = vector.multi_reduction <add>, %8, %cst [0] : vector<16x128xf32> to vector<128xf32>
    %11 = vector.shape_cast %10 : vector<128xf32> to vector<1x128xf32>
    %12 = vector.shape_cast %11 : vector<1x128xf32> to vector<1x1x128xf32>
    %13 = arith.addf %9, %12 : vector<1x1x128xf32>
    %c0_9 = arith.constant 0 : index
    %c0_10 = arith.constant 0 : index
    %c0_11 = arith.constant 0 : index
    %14 = vector.load %arg5[%c0_9, %c0_10, %c0_11] : memref<1x1x128xf32, #tpu.memory_space<vmem>>, vector<1x1x128xf32>
    tpu.vector_store %arg5[%c0_9, %c0_10, %c0_11], %13 {strides = array<i32>} : memref<1x1x128xf32, #tpu.memory_space<vmem>>, vector<1x1x128xf32>,
    return
  }
  func.func @transform_0(%arg0: i32, %arg1: i32) -> (i32, i32) {
    %c1_i32 = arith.constant 1 : i32
    %0 = arith.muli %arg0, %c1_i32 : i32
    %1 = arith.addi %0, %arg1 : i32
    %c0_i32 = arith.constant 0 : i32
    %2 = arith.minsi %1, %c0_i32 : i32
    %c0_i32_0 = arith.constant 0 : i32
    %c0_i32_1 = arith.constant 0 : i32
    return %2, %c0_i32_0 : i32, i32
  }
  func.func @transform_1(%arg0: i32, %arg1: i32) -> (i32, i32) {
    %c1_i32 = arith.constant 1 : i32
    %0 = arith.muli %arg0, %c1_i32 : i32
    %1 = arith.addi %0, %arg1 : i32
    %c0_i32 = arith.constant 0 : i32
    %2 = arith.minsi %1, %c0_i32 : i32
    %c0_i32_0 = arith.constant 0 : i32
    %c0_i32_1 = arith.constant 0 : i32
    return %2, %c0_i32_0 : i32, i32
  }
  func.func @transform_2(%arg0: i32, %arg1: i32) -> (i32, i32) {
    %c1_i32 = arith.constant 1 : i32
    %0 = arith.muli %arg0, %c1_i32 : i32
    %1 = arith.addi %0, %arg1 : i32
    %c0_i32 = arith.constant 0 : i32
    %2 = arith.minsi %1, %c0_i32 : i32
    %c0_i32_0 = arith.constant 0 : i32
    %c0_i32_1 = arith.constant 0 : i32
    return %2, %c0_i32_0 : i32, i32
  }
  func.func @transform_3(%arg0: i32, %arg1: i32) -> (i32, i32, i32) {
    %c0_i32 = arith.constant 0 : i32
    %c0_i32_0 = arith.constant 0 : i32
    %c0_i32_1 = arith.constant 0 : i32
    return %arg0, %c0_i32, %c0_i32_0 : i32, i32, i32
  }
}

</mosaic_0001>

<llo_original>
// kernel: mask_loss_forward.1
$region0: #{mask_loss_forward.1}
  #allocation0 [shape = 'u32[]', space=smem, size = 0x4, offset = 0x4, fixed_abs, tag = 'smem constant byte address 0x4 - core index']
  #allocation1 [shape = 'u32[72,128]{1,0:T(1,128)}', space=vmem, size = 0x9000, scoped, tag = 'internal scratch']
  %s0 = inlined_call_operand.vmem [shape: f32[16,128], index: 0, kind: input, shape index: {}]
  %s1 = inlined_call_operand.vmem [shape: f32[16,128], index: 1, kind: input, shape index: {}]
  %s2 = inlined_call_operand.vmem [shape: f32[16,128], index: 2, kind: input, shape index: {}]
  %s3 = inlined_call_operand.vmem [shape: f32[1,1,128], index: 3, kind: output, shape index: {}]
  %s4 = sld [smem:[#allocation0]]
  $region26: #{mask_loss_forward.1} parent=0
    _
  %s6 = ssub.s32 1, %s4
  %s7 = scalar_select 0, %s6, %s4
  // Predicated region
  $region2: #{mask_loss_forward.1} parent=0 // pred_check
    _
  $region3: #{mask_loss_forward.1} parent=0 // pred_check_branch
    %9 = sbr.rel (0) target = $region5
  $region4: #{mask_loss_forward.1} parent=0 // pred_region
    %s10 = sadd.s32 0, 0
    %p11 = scmp.lt.s32.totalorder %s10, 0
    %s12 = scalar_select %p11, %s10, 0
    %s13 = smul.u32 2, %s12
    %p14 = scmp.lt.s32.totalorder %s13, 1
    %s15 = scalar_select %p14, %s13, 1
    %s16 = smul.addr %s15, 8
    %s17 = scalar_lea.vmem %s0, %s16
    %s18 = sadd.s32 0, 0
    %p19 = scmp.lt.s32.totalorder %s18, 0
    %s20 = scalar_select %p19, %s18, 0
    %s21 = smul.u32 2, %s20
  $region5: #{mask_loss_forward.1} parent=0 // pred_fallthru
    _
  // Predicated region
  $region6: #{mask_loss_forward.1} parent=0 // pred_check
    _
  $region7: #{mask_loss_forward.1} parent=0 // pred_check_branch
    %23 = sbr.rel (0) target = $region9
  $region8: #{mask_loss_forward.1} parent=0 // pred_region
    %s24 = sadd.s32 0, 0
    %p25 = scmp.lt.s32.totalorder %s24, 0
    %s26 = scalar_select %p25, %s24, 0
    %s27 = smul.u32 2, %s26
    %p28 = scmp.lt.s32.totalorder %s27, 1
    %s29 = scalar_select %p28, %s27, 1
    %s30 = smul.addr %s29, 8
    %s31 = scalar_lea.vmem %s1, %s30
    %s32 = sadd.s32 0, 0
    %p33 = scmp.lt.s32.totalorder %s32, 0
    %s34 = scalar_select %p33, %s32, 0
    %s35 = smul.u32 2, %s34
  $region9: #{mask_loss_forward.1} parent=0 // pred_fallthru
    _
  // Predicated region
  $region10: #{mask_loss_forward.1} parent=0 // pred_check
    _
  $region11: #{mask_loss_forward.1} parent=0 // pred_check_branch
    %37 = sbr.rel (0) target = $region13
  $region12: #{mask_loss_forward.1} parent=0 // pred_region
    %s38 = sadd.s32 0, 0
    %p39 = scmp.lt.s32.totalorder %s38, 0
    %s40 = scalar_select %p39, %s38, 0
    %s41 = smul.u32 2, %s40
    %p42 = scmp.lt.s32.totalorder %s41, 1
    %s43 = scalar_select %p42, %s41, 1
    %s44 = smul.addr %s43, 8
    %s45 = scalar_lea.vmem %s2, %s44
    %s46 = sadd.s32 0, 0
    %p47 = scmp.lt.s32.totalorder %s46, 0
    %s48 = scalar_select %p47, %s46, 0
    %s49 = smul.u32 2, %s48
  $region13: #{mask_loss_forward.1} parent=0 // pred_fallthru
    _
  %s50 = sadd.s32 0, 0
  %p51 = scmp.lt.s32.totalorder %s50, 0
  %s52 = scalar_select %p51, %s50, 0
  %s53 = smul.u32 2, %s52
  %p54 = scmp.lt.s32.totalorder %s53, 1
  %s55 = scalar_select %p54, %s53, 1
  %s56 = smul.addr %s55, 8
  %s57 = scalar_lea.vmem %s0, %s56
  %s58 = sadd.s32 0, 0
  %p59 = scmp.lt.s32.totalorder %s58, 0
  %s60 = scalar_select %p59, %s58, 0
  %s61 = smul.u32 2, %s60
  %p62 = scmp.lt.s32.totalorder %s61, 1
  %s63 = scalar_select %p62, %s61, 1
  %s64 = smul.addr %s63, 8
  %s65 = scalar_lea.vmem %s1, %s64
  %s66 = sadd.s32 0, 0
  %p67 = scmp.lt.s32.totalorder %s66, 0
  %s68 = scalar_select %p67, %s66, 0
  %s69 = smul.u32 2, %s68
  %p70 = scmp.lt.s32.totalorder %s69, 1
  %s71 = scalar_select %p70, %s69, 1
  %s72 = smul.addr %s71, 8
  %s73 = scalar_lea.vmem %s2, %s72
  %s74 = sadd.s32 0, 0
  %p75 = scmp.lt.s32.totalorder %s74, 0
  %s76 = scalar_select %p75, %s74, 0
  %s77 = smul.u32 2, %s76
  %p78 = scmp.lt.s32.totalorder %s77, 1
  %s79 = scalar_select %p78, %s77, 1
  %s80 = smul.addr %s79, 8
  %s81 = scalar_lea.vmem %s0, %s80
  %s82 = sadd.s32 0, 0
  %p83 = scmp.lt.s32.totalorder %s82, 0
  %s84 = scalar_select %p83, %s82, 0
  %s85 = smul.u32 2, %s84
  %s86 = sadd.s32 0, 0
  %p87 = scmp.lt.s32.totalorder %s86, 0
  %s88 = scalar_select %p87, %s86, 0
  %s89 = smul.u32 2, %s88
  %p90 = scmp.lt.s32.totalorder %s89, 1
  %s91 = scalar_select %p90, %s89, 1
  %s92 = smul.addr %s91, 8
  %s93 = scalar_lea.vmem %s1, %s92
  %s94 = sadd.s32 0, 0
  %p95 = scmp.lt.s32.totalorder %s94, 0
  %s96 = scalar_select %p95, %s94, 0
  %s97 = smul.u32 2, %s96
  %s98 = sadd.s32 0, 0
  %p99 = scmp.lt.s32.totalorder %s98, 0
  %s100 = scalar_select %p99, %s98, 0
  %s101 = smul.u32 2, %s100
  %p102 = scmp.lt.s32.totalorder %s101, 1
  %s103 = scalar_select %p102, %s101, 1
  %s104 = smul.addr %s103, 8
  %s105 = scalar_lea.vmem %s2, %s104
  %s106 = sadd.s32 0, 0
  %p107 = scmp.lt.s32.totalorder %s106, 0
  %s108 = scalar_select %p107, %s106, 0
  %s109 = smul.u32 2, %s108
  %p110 = scmp.eq.s32.totalorder 0, 0
  // Predicated region
  $region14: #{mask_loss_forward.1} parent=0 // pred_check
    %p111 = pneg %p110
  $region15: #{mask_loss_forward.1} parent=0 // pred_check_branch
    %113 = sbr.rel (%p111) target = $region17
  $region16: #{mask_loss_forward.1} parent=0 // pred_region
    %114 = vst [vmem:[%s3] sm:$0x1] 0.0
  $region17: #{mask_loss_forward.1} parent=0 // pred_fallthru
    _
  %v115 = vld [vmem:[%s81] sm:$0xff]
  %v116 = vld [vmem:[%s81 + $0x8] sm:$0xff]
  %v117 = vld [vmem:[%s93] sm:$0xff]
  %v118 = vld [vmem:[%s93 + $0x8] sm:$0xff]
  %v119 = vld [vmem:[%s105] sm:$0xff]
  %v120 = vld [vmem:[%s105 + $0x8] sm:$0xff]
  %v121 = vsub.f32 %v115, %v117
  %v122 = vsub.f32 %v116, %v118
  %v123 = vmul.f32 %v121, %v119
  %v124 = vmul.f32 %v122, %v120
  %v125 = vand.u32 2147483647, %v123
  %v126 = vand.u32 2147483647, %v124
  %v127 = vld [vmem:[%s3] sm:$0x1]
  %v128 = vadd.f32 %v125, %v126
  %v129 = vrot.slane %v128, 4
  %v130 = vadd.f32 %v128, %v129
  %v131 = vrot.slane %v130, 2
  %v132 = vadd.f32 %v130, %v131
  %v133 = vrot.slane %v132, 1
  %v134 = vadd.f32 %v132, %v133
  %v135 = vadd.f32 %v127, %v134
  %136 = vst [vmem:[%s3] sm:$0x1] %v135
  // Predicated region
  $region18: #{mask_loss_forward.1} parent=0 // pred_check
    _
  $region19: #{mask_loss_forward.1} parent=0 // pred_check_branch
    %138 = sbr.rel (0) target = $region21
  $region20: #{mask_loss_forward.1} parent=0 // pred_region
    _
  $region21: #{mask_loss_forward.1} parent=0 // pred_fallthru
    _
  // Predicated region
  $region22: #{mask_loss_forward.1} parent=0 // pred_check
    _
  $region23: #{mask_loss_forward.1} parent=0 // pred_check_branch
    %140 = sbr.rel (0) target = $region25
  $region24: #{mask_loss_forward.1} parent=0 // pred_region
    _
  $region25: #{mask_loss_forward.1} parent=0 // pred_fallthru
    _

</llo_original>
